<compile_context>
chip_gen: v7x
topology: tpu7x:2x2x1
jax: 0.10.0
libtpu: 0.0.40
codegen_flags: <defaults>
</compile_context>

<pallas_src>
import jax
import jax.numpy as jnp
from jax.experimental import pallas as pl
from jax.experimental.pallas import tpu as pltpu

FEATURE_D = 512          # nn.Linear in_features  (fixed by the module)
OUT_D = 400              # nn.Linear out_features (fixed by the module)


def _round_up(n, m):
    return ((n + m - 1) // m) * m


def _linear_relu_kernel(x_ref, w_ref, b_ref, o_ref):
    # x_ref: (tb, 512) bf16 | w_ref: (512, 400) bf16 | b_ref: (1, 400) f32
    # o_ref: (tb, 400) f32
    acc = jnp.dot(x_ref[...], w_ref[...], preferred_element_type=jnp.float32)
    acc = acc + b_ref[...]                      # (1, N) broadcasts over batch
    o_ref[...] = jnp.maximum(acc, 0.0).astype(o_ref.dtype)


def prepare_generate_word_params(w, b):
    """One-time parameter prep (hoisted out of the per-call forward).

    w: (512, 400) float  -- transposed torch weight (in_features, out_features)
    b: (400,)    float
    Returns (w_bf16: (512, 400) bfloat16, b_f32: (1, 400) float32).
    Cache these and reuse them for every forward call.
    """
    assert w.shape == (FEATURE_D, OUT_D) and b.shape == (OUT_D,)
    return w.astype(jnp.bfloat16), b.reshape(1, OUT_D).astype(jnp.float32)


def _choose_batch_tile(B, tile_b):
    # Tiles are multiples of 16 rows (bf16 sublane packing), capped by the batch.
    b_al = _round_up(B, 16)
    tb = min(tile_b, b_al)
    # If the whole batch fits in one tile but is big enough to split, use two
    # grid steps so v7x's second TensorCore gets a share of the "parallel" axis.
    if tb == b_al and b_al >= 32:
        tb = _round_up((b_al + 1) // 2, 16)
    return max(16, tb)


def generate_word_forward(x, w_bf16, b_f32, *, tile_b=1024):
    """relu(x @ w + b) -- Pallas TPU kernel for Generate_word.forward.

    x:      (B, 512) float32 (cast to bf16 at the kernel boundary, f32 accumulate)
    w_bf16: (512, 400) bfloat16   (from prepare_generate_word_params)
    b_f32:  (1, 400)  float32     (from prepare_generate_word_params)
    """
    B, D = x.shape
    assert D == FEATURE_D
    assert w_bf16.shape == (FEATURE_D, OUT_D) and b_f32.shape == (1, OUT_D)

    x_bf16 = x.astype(jnp.bfloat16)     # halves activation HBM traffic
    tb = _choose_batch_tile(B, tile_b)
    grid = (pl.cdiv(B, tb),)            # ragged tail handled by Pallas masking

    cost = pl.CostEstimate(
        flops=2 * B * FEATURE_D * OUT_D,
        transcendentals=0,
        bytes_accessed=(
            B * FEATURE_D * 2           # x  (bf16)
            + FEATURE_D * OUT_D * 2     # w  (bf16)
            + OUT_D * 4                 # b  (f32)
            + B * OUT_D * 4             # out (f32)
        ),
    )

    return pl.pallas_call(
        _linear_relu_kernel,
        out_shape=jax.ShapeDtypeStruct((B, OUT_D), jnp.float32),
        grid_spec=pltpu.PrefetchScalarGridSpec(
            num_scalar_prefetch=0,
            grid=grid,
            in_specs=[
                # activation batch tile; K (=512) kept whole (it is small)
                pl.BlockSpec((tb, FEATURE_D), lambda i: (i, 0)),
                # weight / bias resident across all grid steps: constant
                # index_map, single-buffered (no pointless double-buffer).
                pl.BlockSpec((FEATURE_D, OUT_D), lambda i: (0, 0),
                             pipeline_mode=pl.Buffered(1)),
                pl.BlockSpec((1, OUT_D), lambda i: (0, 0),
                             pipeline_mode=pl.Buffered(1)),
            ],
            out_specs=pl.BlockSpec((tb, OUT_D), lambda i: (i, 0)),
        ),
        compiler_params=pltpu.CompilerParams(
            dimension_semantics=("parallel",),
        ),
        cost_estimate=cost,
    )(x_bf16, w_bf16, b_f32)


if __name__ == "__main__":
    key = jax.random.PRNGKey(0)
    kx, kw, kb = jax.random.split(key, 3)

    # Deterministic params mimicking nn.Linear's uniform(-1/sqrt(fan_in), ...)
    bound = 1.0 / (FEATURE_D ** 0.5)
    w = jax.random.uniform(kw, (FEATURE_D, OUT_D), jnp.float32, -bound, bound)
    b = jax.random.uniform(kb, (OUT_D,), jnp.float32, -bound, bound)

    # One-time (hoisted) parameter prep — reused for every forward call.
    w_p, b_p = prepare_generate_word_params(w, b)

    fwd = jax.jit(generate_word_forward)

    def ref_f32(xv):
        return jnp.maximum(xv @ w + b[None, :], 0.0)

    def ref_bf16(xv):
        acc = jnp.dot(xv.astype(jnp.bfloat16), w.astype(jnp.bfloat16),
                      preferred_element_type=jnp.float32)
        return jnp.maximum(acc + b[None, :], 0.0)

    # Small batch: single grid step.
    batch = 8
    x = jax.random.normal(kx, (batch, FEATURE_D), dtype=jnp.float32)
    out = jax.block_until_ready(fwd(x, w_p, b_p))
    assert out.shape == (batch, OUT_D)
    assert jnp.allclose(out, ref_bf16(x), atol=2e-3, rtol=2e-3), "mismatch vs bf16 reference"
    assert jnp.allclose(out, ref_f32(x), atol=5e-2, rtol=5e-2), "mismatch vs f32 reference"

    # Non-multiple batch: >= 2 grid steps with a ragged (masked) tail.
    batch2 = 50
    x2 = jax.random.normal(jax.random.fold_in(kx, 1), (batch2, FEATURE_D),
                           dtype=jnp.float32)
    out2 = jax.block_until_ready(fwd(x2, w_p, b_p))
    assert out2.shape == (batch2, OUT_D)
    assert jnp.allclose(out2, ref_bf16(x2), atol=2e-3, rtol=2e-3), "mismatch vs bf16 reference (ragged)"
    assert jnp.allclose(out2, ref_f32(x2), atol=5e-2, rtol=5e-2), "mismatch vs f32 reference (ragged)"

    print("KERNEL_OK")
</pallas_src>

<mosaic_0001>
module attributes {stable_mosaic.version = 11 : i64} {
  func.func @_linear_relu_kernel(%arg0: i32, %arg1: memref<16x512xbf16, #tpu.memory_space<vmem>>, %arg2: memref<512x400xbf16, #tpu.memory_space<vmem>>, %arg3: memref<1x400xf32, #tpu.memory_space<vmem>>, %arg4: memref<16x400xf32, #tpu.memory_space<vmem>>) attributes {dimension_semantics = [#tpu.dimension_semantics<parallel>], iteration_bounds = array<i64: 1>, scalar_prefetch = 0 : i64, scratch_operands = 0 : i64, tpu.core_type = #tpu.core_type<tc>, window_params = [{transform_indices = @transform_0, window_bounds = array<i64: 16, 512>}, {pipeline_mode = #tpu.pipeline_mode<synchronous>, transform_indices = @transform_1, window_bounds = array<i64: 512, 400>}, {pipeline_mode = #tpu.pipeline_mode<synchronous>, transform_indices = @transform_2, window_bounds = array<i64: 1, 400>}, {transform_indices = @transform_3, window_bounds = array<i64: 16, 400>}]} {
    %c0 = arith.constant 0 : index
    %c0_0 = arith.constant 0 : index
    %0 = vector.load %arg1[%c0, %c0_0] : memref<16x512xbf16, #tpu.memory_space<vmem>>, vector<16x512xbf16>
    %c0_1 = arith.constant 0 : index
    %c0_2 = arith.constant 0 : index
    %1 = vector.load %arg2[%c0_1, %c0_2] : memref<512x400xbf16, #tpu.memory_space<vmem>>, vector<512x400xbf16>
    %cst = arith.constant dense<0.000000e+00> : vector<16x400xf32>
    %2 = tpu.matmul %0, %1, %cst {dimension_numbers = #tpu.dot_dimension_numbers<[1], [0], [0], [1], [0, 0, 1, 1], [], []>} : vector<16x512xbf16>, vector<512x400xbf16>, vector<16x400xf32> -> vector<16x400xf32>
    %c0_3 = arith.constant 0 : index
    %c0_4 = arith.constant 0 : index
    %3 = vector.load %arg3[%c0_3, %c0_4] : memref<1x400xf32, #tpu.memory_space<vmem>>, vector<1x400xf32>
    %4 = vector.broadcast %3 : vector<1x400xf32> to vector<16x400xf32>
    %5 = arith.addf %2, %4 : vector<16x400xf32>
    %cst_5 = arith.constant 0.000000e+00 : f32
    %6 = vector.broadcast %cst_5 : f32 to vector<16x400xf32>
    %7 = arith.maximumf %5, %6 : vector<16x400xf32>
    %c0_6 = arith.constant 0 : index
    %c0_7 = arith.constant 0 : index
    %8 = vector.load %arg4[%c0_6, %c0_7] : memref<16x400xf32, #tpu.memory_space<vmem>>, vector<16x400xf32>
    tpu.vector_store %arg4[%c0_6, %c0_7], %7 {strides = array<i32>} : memref<16x400xf32, #tpu.memory_space<vmem>>, vector<16x400xf32>,
    return
  }
  func.func @transform_0(%arg0: i32) -> (i32, i32) {
    %c0_i32 = arith.constant 0 : i32
    %c0_i32_0 = arith.constant 0 : i32
    return %arg0, %c0_i32 : i32, i32
  }
  func.func @transform_1(%arg0: i32) -> (i32, i32) {
    %c0_i32 = arith.constant 0 : i32
    %c0_i32_0 = arith.constant 0 : i32
    %c0_i32_1 = arith.constant 0 : i32
    return %c0_i32, %c0_i32_0 : i32, i32
  }
  func.func @transform_2(%arg0: i32) -> (i32, i32) {
    %c0_i32 = arith.constant 0 : i32
    %c0_i32_0 = arith.constant 0 : i32
    %c0_i32_1 = arith.constant 0 : i32
    return %c0_i32, %c0_i32_0 : i32, i32
  }
  func.func @transform_3(%arg0: i32) -> (i32, i32) {
    %c0_i32 = arith.constant 0 : i32
    %c0_i32_0 = arith.constant 0 : i32
    return %arg0, %c0_i32 : i32, i32
  }
}

</mosaic_0001>

<llo_original>
// kernel: generate_word_forward.1
$region0: #{generate_word_forward.1}
  #allocation0 [shape = 'u32[]', space=smem, size = 0x4, offset = 0x4, fixed_abs, tag = 'smem constant byte address 0x4 - core index']
  #allocation1 [shape = 'u32[144,128]{1,0:T(1,128)}', space=vmem, size = 0x12000, scoped, tag = 'internal scratch']
  %s0 = inlined_call_operand.vmem [shape: bf16[8,512], index: 0, kind: input, shape index: {}]
  %s1 = inlined_call_operand.vmem [shape: bf16[512,400], index: 1, kind: input, shape index: {}]
  %s2 = inlined_call_operand.vmem [shape: f32[1,400], index: 2, kind: input, shape index: {}]
  %s3 = inlined_call_operand.hbm [shape: f32[8,400], index: 3, kind: output, shape index: {}]
  %s4 = sld [smem:[#allocation0]]
  $region22: #{generate_word_forward.1} parent=0
    _
  %s6 = ssub.s32 1, %s4
  %s7 = scalar_select 0, %s6, %s4
  $region1: #{generate_word_forward.1} parent=0
    #allocation2 [shape = 'u8[32768]{0}', space=vmem, size = 0x8000, scoped, tag = 'output window, operand 0, single buffered']
    #allocation3 [shape = 's32[1]{0}', space=sflag, size = 0x4, scoped, tag = 'scoped memory for generate_word_forward.1']
    %8 = vsyncpa [#allocation3], 0
    // Predicated region
    $region2: #{generate_word_forward.1} parent=1 // pred_check
      _
    $region3: #{generate_word_forward.1} parent=1 // pred_check_branch
      %10 = sbr.rel (0) target = $region5
    $region4: #{generate_word_forward.1} parent=1 // pred_region
      _
    $region5: #{generate_word_forward.1} parent=1 // pred_fallthru
      _
    // Predicated region
    $region6: #{generate_word_forward.1} parent=1 // pred_check
      _
    $region7: #{generate_word_forward.1} parent=1 // pred_check_branch
      %12 = sbr.rel (0) target = $region9
    $region8: #{generate_word_forward.1} parent=1 // pred_region
      _
    $region9: #{generate_word_forward.1} parent=1 // pred_fallthru
      _
    // Predicated region
    $region10: #{generate_word_forward.1} parent=1 // pred_check
      _
    $region11: #{generate_word_forward.1} parent=1 // pred_check_branch
      %14 = sbr.rel (0) target = $region13
    $region12: #{generate_word_forward.1} parent=1 // pred_region
      _
    $region13: #{generate_word_forward.1} parent=1 // pred_fallthru
      _
    %v15 = vld [vmem:[%s0] sm:$0xff]
    %v16 = vld [vmem:[%s0 + $0x8] sm:$0xff]
    %v17 = vld [vmem:[%s0 + $0x10] sm:$0xff]
    %v18 = vld [vmem:[%s0 + $0x18] sm:$0xff]
    %v19 = vld [vmem:[%s1] sm:$0xff]
    %v20 = vld [vmem:[%s1 + $0x8] sm:$0xff]
    %v21 = vld [vmem:[%s1 + $0x10] sm:$0xff]
    %v22 = vld [vmem:[%s1 + $0x18] sm:$0xff]
    %v23 = vld [vmem:[%s1 + $0x20] sm:$0xff]
    %v24 = vld [vmem:[%s1 + $0x28] sm:$0xff]
    %v25 = vld [vmem:[%s1 + $0x30] sm:$0xff]
    %v26 = vld [vmem:[%s1 + $0x38] sm:$0xff]
    %v27 = vld [vmem:[%s1 + $0x40] sm:$0xff]
    %v28 = vld [vmem:[%s1 + $0x48] sm:$0xff]
    %v29 = vld [vmem:[%s1 + $0x50] sm:$0xff]
    %v30 = vld [vmem:[%s1 + $0x58] sm:$0xff]
    %v31 = vld [vmem:[%s1 + $0x60] sm:$0xff]
    %v32 = vld [vmem:[%s1 + $0x68] sm:$0xff]
    %v33 = vld [vmem:[%s1 + $0x70] sm:$0xff]
    %v34 = vld [vmem:[%s1 + $0x78] sm:$0xff]
    %v35 = vld [vmem:[%s1 + $0x80] sm:$0xff]
    %v36 = vld [vmem:[%s1 + $0x88] sm:$0xff]
    %v37 = vld [vmem:[%s1 + $0x90] sm:$0xff]
    %v38 = vld [vmem:[%s1 + $0x98] sm:$0xff]
    %v39 = vld [vmem:[%s1 + $0xa0] sm:$0xff]
    %v40 = vld [vmem:[%s1 + $0xa8] sm:$0xff]
    %v41 = vld [vmem:[%s1 + $0xb0] sm:$0xff]
    %v42 = vld [vmem:[%s1 + $0xb8] sm:$0xff]
    %v43 = vld [vmem:[%s1 + $0xc0] sm:$0xff]
    %v44 = vld [vmem:[%s1 + $0xc8] sm:$0xff]
    %v45 = vld [vmem:[%s1 + $0xd0] sm:$0xff]
    %v46 = vld [vmem:[%s1 + $0xd8] sm:$0xff]
    %v47 = vld [vmem:[%s1 + $0xe0] sm:$0xff]
    %v48 = vld [vmem:[%s1 + $0xe8] sm:$0xff]
    %v49 = vld [vmem:[%s1 + $0xf0] sm:$0xff]
    %v50 = vld [vmem:[%s1 + $0xf8] sm:$0xff]
    %v51 = vld [vmem:[%s1 + $0x100] sm:$0xff]
    %v52 = vld [vmem:[%s1 + $0x108] sm:$0xff]
    %v53 = vld [vmem:[%s1 + $0x110] sm:$0xff]
    %v54 = vld [vmem:[%s1 + $0x118] sm:$0xff]
    %v55 = vld [vmem:[%s1 + $0x120] sm:$0xff]
    %v56 = vld [vmem:[%s1 + $0x128] sm:$0xff]
    %v57 = vld [vmem:[%s1 + $0x130] sm:$0xff]
    %v58 = vld [vmem:[%s1 + $0x138] sm:$0xff]
    %v59 = vld [vmem:[%s1 + $0x140] sm:$0xff]
    %v60 = vld [vmem:[%s1 + $0x148] sm:$0xff]
    %v61 = vld [vmem:[%s1 + $0x150] sm:$0xff]
    %v62 = vld [vmem:[%s1 + $0x158] sm:$0xff]
    %v63 = vld [vmem:[%s1 + $0x160] sm:$0xff]
    %v64 = vld [vmem:[%s1 + $0x168] sm:$0xff]
    %v65 = vld [vmem:[%s1 + $0x170] sm:$0xff]
    %v66 = vld [vmem:[%s1 + $0x178] sm:$0xff]
    %v67 = vld [vmem:[%s1 + $0x180] sm:$0xff]
    %v68 = vld [vmem:[%s1 + $0x188] sm:$0xff]
    %v69 = vld [vmem:[%s1 + $0x190] sm:$0xff]
    %v70 = vld [vmem:[%s1 + $0x198] sm:$0xff]
    %v71 = vld [vmem:[%s1 + $0x1a0] sm:$0xff]
    %v72 = vld [vmem:[%s1 + $0x1a8] sm:$0xff]
    %v73 = vld [vmem:[%s1 + $0x1b0] sm:$0xff]
    %v74 = vld [vmem:[%s1 + $0x1b8] sm:$0xff]
    %v75 = vld [vmem:[%s1 + $0x1c0] sm:$0xff]
    %v76 = vld [vmem:[%s1 + $0x1c8] sm:$0xff]
    %v77 = vld [vmem:[%s1 + $0x1d0] sm:$0xff]
    %v78 = vld [vmem:[%s1 + $0x1d8] sm:$0xff]
    %v79 = vld [vmem:[%s1 + $0x1e0] sm:$0xff]
    %v80 = vld [vmem:[%s1 + $0x1e8] sm:$0xff]
    %v81 = vld [vmem:[%s1 + $0x1f0] sm:$0xff]
    %v82 = vld [vmem:[%s1 + $0x1f8] sm:$0xff]
    %v83 = vld [vmem:[%s1 + $0x200] sm:$0xff]
    %v84 = vld [vmem:[%s1 + $0x208] sm:$0xff]
    %v85 = vld [vmem:[%s1 + $0x210] sm:$0xff]
    %v86 = vld [vmem:[%s1 + $0x218] sm:$0xff]
    %v87 = vld [vmem:[%s1 + $0x220] sm:$0xff]
    %v88 = vld [vmem:[%s1 + $0x228] sm:$0xff]
    %v89 = vld [vmem:[%s1 + $0x230] sm:$0xff]
    %v90 = vld [vmem:[%s1 + $0x238] sm:$0xff]
    %v91 = vld [vmem:[%s1 + $0x240] sm:$0xff]
    %v92 = vld [vmem:[%s1 + $0x248] sm:$0xff]
    %v93 = vld [vmem:[%s1 + $0x250] sm:$0xff]
    %v94 = vld [vmem:[%s1 + $0x258] sm:$0xff]
    %v95 = vld [vmem:[%s1 + $0x260] sm:$0xff]
    %v96 = vld [vmem:[%s1 + $0x268] sm:$0xff]
    %v97 = vld [vmem:[%s1 + $0x270] sm:$0xff]
    %v98 = vld [vmem:[%s1 + $0x278] sm:$0xff]
    %v99 = vld [vmem:[%s1 + $0x280] sm:$0xff]
    %v100 = vld [vmem:[%s1 + $0x288] sm:$0xff]
    %v101 = vld [vmem:[%s1 + $0x290] sm:$0xff]
    %v102 = vld [vmem:[%s1 + $0x298] sm:$0xff]
    %v103 = vld [vmem:[%s1 + $0x2a0] sm:$0xff]
    %v104 = vld [vmem:[%s1 + $0x2a8] sm:$0xff]
    %v105 = vld [vmem:[%s1 + $0x2b0] sm:$0xff]
    %v106 = vld [vmem:[%s1 + $0x2b8] sm:$0xff]
    %v107 = vld [vmem:[%s1 + $0x2c0] sm:$0xff]
    %v108 = vld [vmem:[%s1 + $0x2c8] sm:$0xff]
    %v109 = vld [vmem:[%s1 + $0x2d0] sm:$0xff]
    %v110 = vld [vmem:[%s1 + $0x2d8] sm:$0xff]
    %v111 = vld [vmem:[%s1 + $0x2e0] sm:$0xff]
    %v112 = vld [vmem:[%s1 + $0x2e8] sm:$0xff]
    %v113 = vld [vmem:[%s1 + $0x2f0] sm:$0xff]
    %v114 = vld [vmem:[%s1 + $0x2f8] sm:$0xff]
    %v115 = vld [vmem:[%s1 + $0x300] sm:$0xff]
    %v116 = vld [vmem:[%s1 + $0x308] sm:$0xff]
    %v117 = vld [vmem:[%s1 + $0x310] sm:$0xff]
    %v118 = vld [vmem:[%s1 + $0x318] sm:$0xff]
    %v119 = vld [vmem:[%s1 + $0x320] sm:$0xff]
    %v120 = vld [vmem:[%s1 + $0x328] sm:$0xff]
    %v121 = vld [vmem:[%s1 + $0x330] sm:$0xff]
    %v122 = vld [vmem:[%s1 + $0x338] sm:$0xff]
    %v123 = vld [vmem:[%s1 + $0x340] sm:$0xff]
    %v124 = vld [vmem:[%s1 + $0x348] sm:$0xff]
    %v125 = vld [vmem:[%s1 + $0x350] sm:$0xff]
    %v126 = vld [vmem:[%s1 + $0x358] sm:$0xff]
    %v127 = vld [vmem:[%s1 + $0x360] sm:$0xff]
    %v128 = vld [vmem:[%s1 + $0x368] sm:$0xff]
    %v129 = vld [vmem:[%s1 + $0x370] sm:$0xff]
    %v130 = vld [vmem:[%s1 + $0x378] sm:$0xff]
    %v131 = vld [vmem:[%s1 + $0x380] sm:$0xff]
    %v132 = vld [vmem:[%s1 + $0x388] sm:$0xff]
    %v133 = vld [vmem:[%s1 + $0x390] sm:$0xff]
    %v134 = vld [vmem:[%s1 + $0x398] sm:$0xff]
    %v135 = vld [vmem:[%s1 + $0x3a0] sm:$0xff]
    %v136 = vld [vmem:[%s1 + $0x3a8] sm:$0xff]
    %v137 = vld [vmem:[%s1 + $0x3b0] sm:$0xff]
    %v138 = vld [vmem:[%s1 + $0x3b8] sm:$0xff]
    %v139 = vld [vmem:[%s1 + $0x3c0] sm:$0xff]
    %v140 = vld [vmem:[%s1 + $0x3c8] sm:$0xff]
    %v141 = vld [vmem:[%s1 + $0x3d0] sm:$0xff]
    %v142 = vld [vmem:[%s1 + $0x3d8] sm:$0xff]
    %v143 = vld [vmem:[%s1 + $0x3e0] sm:$0xff]
    %v144 = vld [vmem:[%s1 + $0x3e8] sm:$0xff]
    %v145 = vld [vmem:[%s1 + $0x3f0] sm:$0xff]
    %v146 = vld [vmem:[%s1 + $0x3f8] sm:$0xff]
    %v147 = vld [vmem:[%s2] sm:$0xf]
    %v149 = vlaneseq
    %v150 = vshrl.u32 %v149, 7
    %v151 = vsub.s32 0, %v150
    %v152 = vrot.slane %v147, %v151
    %v153 = vlaneseq
    %v154 = vshrl.u32 %v153, 7
    %v155 = vsub.s32 1, %v154
    %v156 = vrot.slane %v147, %v155
    %v157 = vlaneseq
    %v158 = vshrl.u32 %v157, 7
    %v159 = vsub.s32 2, %v158
    %v160 = vrot.slane %v147, %v159
    %v161 = vlaneseq
    %v162 = vshrl.u32 %v161, 7
    %v163 = vsub.s32 3, %v162
    %v164 = vrot.slane %v147, %v163
    %v173 = vunpack.c.l.b16 %v15
    %v174 = vunpack.c.h.b16 %v15
    %v175 = vunpack.c.l.b16 %v16
    %v176 = vunpack.c.h.b16 %v16
    %v177 = vunpack.c.l.b16 %v17
    %v178 = vunpack.c.h.b16 %v17
    %v179 = vunpack.c.l.b16 %v18
    %v180 = vunpack.c.h.b16 %v18
    %v181 = vpack.c.b16 %v177, %v173
    %v182 = vpack.c.b16 %v178, %v174
    %v183 = vpack.c.b16 %v179, %v175
    %v184 = vpack.c.b16 %v180, %v176
    %v317 = vunpack.c.l.b16 %v19
    %v318 = vunpack.c.h.b16 %v19
    %v319 = vunpack.c.l.b16 %v20
    %v320 = vunpack.c.h.b16 %v20
    %v321 = vunpack.c.l.b16 %v21
    %v322 = vunpack.c.h.b16 %v21
    %v323 = vunpack.c.l.b16 %v22
    %v324 = vunpack.c.h.b16 %v22
    %v325 = vunpack.c.l.b16 %v23
    %v326 = vunpack.c.h.b16 %v23
    %v327 = vunpack.c.l.b16 %v24
    %v328 = vunpack.c.h.b16 %v24
    %v329 = vunpack.c.l.b16 %v25
    %v330 = vunpack.c.h.b16 %v25
    %v331 = vunpack.c.l.b16 %v26
    %v332 = vunpack.c.h.b16 %v26
    %v333 = vunpack.c.l.b16 %v27
    %v334 = vunpack.c.h.b16 %v27
    %v335 = vunpack.c.l.b16 %v28
    %v336 = vunpack.c.h.b16 %v28
    %v337 = vunpack.c.l.b16 %v29
    %v338 = vunpack.c.h.b16 %v29
    %v339 = vunpack.c.l.b16 %v30
    %v340 = vunpack.c.h.b16 %v30
    %v341 = vunpack.c.l.b16 %v31
    %v342 = vunpack.c.h.b16 %v31
    %v343 = vunpack.c.l.b16 %v32
    %v344 = vunpack.c.h.b16 %v32
    %v345 = vunpack.c.l.b16 %v33
    %v346 = vunpack.c.h.b16 %v33
    %v347 = vunpack.c.l.b16 %v34
    %v348 = vunpack.c.h.b16 %v34
    %v349 = vunpack.c.l.b16 %v35
    %v350 = vunpack.c.h.b16 %v35
    %v351 = vunpack.c.l.b16 %v36
    %v352 = vunpack.c.h.b16 %v36
    %v353 = vunpack.c.l.b16 %v37
    %v354 = vunpack.c.h.b16 %v37
    %v355 = vunpack.c.l.b16 %v38
    %v356 = vunpack.c.h.b16 %v38
    %v357 = vunpack.c.l.b16 %v39
    %v358 = vunpack.c.h.b16 %v39
    %v359 = vunpack.c.l.b16 %v40
    %v360 = vunpack.c.h.b16 %v40
    %v361 = vunpack.c.l.b16 %v41
    %v362 = vunpack.c.h.b16 %v41
    %v363 = vunpack.c.l.b16 %v42
    %v364 = vunpack.c.h.b16 %v42
    %v365 = vunpack.c.l.b16 %v43
    %v366 = vunpack.c.h.b16 %v43
    %v367 = vunpack.c.l.b16 %v44
    %v368 = vunpack.c.h.b16 %v44
    %v369 = vunpack.c.l.b16 %v45
    %v370 = vunpack.c.h.b16 %v45
    %v371 = vunpack.c.l.b16 %v46
    %v372 = vunpack.c.h.b16 %v46
    %v373 = vunpack.c.l.b16 %v47
    %v374 = vunpack.c.h.b16 %v47
    %v375 = vunpack.c.l.b16 %v48
    %v376 = vunpack.c.h.b16 %v48
    %v377 = vunpack.c.l.b16 %v49
    %v378 = vunpack.c.h.b16 %v49
    %v379 = vunpack.c.l.b16 %v50
    %v380 = vunpack.c.h.b16 %v50
    %v381 = vunpack.c.l.b16 %v51
    %v382 = vunpack.c.h.b16 %v51
    %v383 = vunpack.c.l.b16 %v52
    %v384 = vunpack.c.h.b16 %v52
    %v385 = vunpack.c.l.b16 %v53
    %v386 = vunpack.c.h.b16 %v53
    %v387 = vunpack.c.l.b16 %v54
    %v388 = vunpack.c.h.b16 %v54
    %v389 = vunpack.c.l.b16 %v55
    %v390 = vunpack.c.h.b16 %v55
    %v391 = vunpack.c.l.b16 %v56
    %v392 = vunpack.c.h.b16 %v56
    %v393 = vunpack.c.l.b16 %v57
    %v394 = vunpack.c.h.b16 %v57
    %v395 = vunpack.c.l.b16 %v58
    %v396 = vunpack.c.h.b16 %v58
    %v397 = vunpack.c.l.b16 %v59
    %v398 = vunpack.c.h.b16 %v59
    %v399 = vunpack.c.l.b16 %v60
    %v400 = vunpack.c.h.b16 %v60
    %v401 = vunpack.c.l.b16 %v61
    %v402 = vunpack.c.h.b16 %v61
    %v403 = vunpack.c.l.b16 %v62
    %v404 = vunpack.c.h.b16 %v62
    %v405 = vunpack.c.l.b16 %v63
    %v406 = vunpack.c.h.b16 %v63
    %v407 = vunpack.c.l.b16 %v64
    %v408 = vunpack.c.h.b16 %v64
    %v409 = vunpack.c.l.b16 %v65
    %v410 = vunpack.c.h.b16 %v65
    %v411 = vunpack.c.l.b16 %v66
    %v412 = vunpack.c.h.b16 %v66
    %v413 = vunpack.c.l.b16 %v67
    %v414 = vunpack.c.h.b16 %v67
    %v415 = vunpack.c.l.b16 %v68
    %v416 = vunpack.c.h.b16 %v68
    %v417 = vunpack.c.l.b16 %v69
    %v418 = vunpack.c.h.b16 %v69
    %v419 = vunpack.c.l.b16 %v70
    %v420 = vunpack.c.h.b16 %v70
    %v421 = vunpack.c.l.b16 %v71
    %v422 = vunpack.c.h.b16 %v71
    %v423 = vunpack.c.l.b16 %v72
    %v424 = vunpack.c.h.b16 %v72
    %v425 = vunpack.c.l.b16 %v73
    %v426 = vunpack.c.h.b16 %v73
    %v427 = vunpack.c.l.b16 %v74
    %v428 = vunpack.c.h.b16 %v74
    %v429 = vunpack.c.l.b16 %v75
    %v430 = vunpack.c.h.b16 %v75
    %v431 = vunpack.c.l.b16 %v76
    %v432 = vunpack.c.h.b16 %v76
    %v433 = vunpack.c.l.b16 %v77
    %v434 = vunpack.c.h.b16 %v77
    %v435 = vunpack.c.l.b16 %v78
    %v436 = vunpack.c.h.b16 %v78
    %v437 = vunpack.c.l.b16 %v79
    %v438 = vunpack.c.h.b16 %v79
    %v439 = vunpack.c.l.b16 %v80
    %v440 = vunpack.c.h.b16 %v80
    %v441 = vunpack.c.l.b16 %v81
    %v442 = vunpack.c.h.b16 %v81
    %v443 = vunpack.c.l.b16 %v82
    %v444 = vunpack.c.h.b16 %v82
    %v445 = vunpack.c.l.b16 %v83
    %v446 = vunpack.c.h.b16 %v83
    %v447 = vunpack.c.l.b16 %v84
    %v448 = vunpack.c.h.b16 %v84
    %v449 = vunpack.c.l.b16 %v85
    %v450 = vunpack.c.h.b16 %v85
    %v451 = vunpack.c.l.b16 %v86
    %v452 = vunpack.c.h.b16 %v86
    %v453 = vunpack.c.l.b16 %v87
    %v454 = vunpack.c.h.b16 %v87
    %v455 = vunpack.c.l.b16 %v88
    %v456 = vunpack.c.h.b16 %v88
    %v457 = vunpack.c.l.b16 %v89
    %v458 = vunpack.c.h.b16 %v89
    %v459 = vunpack.c.l.b16 %v90
    %v460 = vunpack.c.h.b16 %v90
    %v461 = vunpack.c.l.b16 %v91
    %v462 = vunpack.c.h.b16 %v91
    %v463 = vunpack.c.l.b16 %v92
    %v464 = vunpack.c.h.b16 %v92
    %v465 = vunpack.c.l.b16 %v93
    %v466 = vunpack.c.h.b16 %v93
    %v467 = vunpack.c.l.b16 %v94
    %v468 = vunpack.c.h.b16 %v94
    %v469 = vunpack.c.l.b16 %v95
    %v470 = vunpack.c.h.b16 %v95
    %v471 = vunpack.c.l.b16 %v96
    %v472 = vunpack.c.h.b16 %v96
    %v473 = vunpack.c.l.b16 %v97
    %v474 = vunpack.c.h.b16 %v97
    %v475 = vunpack.c.l.b16 %v98
    %v476 = vunpack.c.h.b16 %v98
    %v477 = vunpack.c.l.b16 %v99
    %v478 = vunpack.c.h.b16 %v99
    %v479 = vunpack.c.l.b16 %v100
    %v480 = vunpack.c.h.b16 %v100
    %v481 = vunpack.c.l.b16 %v101
    %v482 = vunpack.c.h.b16 %v101
    %v483 = vunpack.c.l.b16 %v102
    %v484 = vunpack.c.h.b16 %v102
    %v485 = vunpack.c.l.b16 %v103
    %v486 = vunpack.c.h.b16 %v103
    %v487 = vunpack.c.l.b16 %v104
    %v488 = vunpack.c.h.b16 %v104
    %v489 = vunpack.c.l.b16 %v105
    %v490 = vunpack.c.h.b16 %v105
    %v491 = vunpack.c.l.b16 %v106
    %v492 = vunpack.c.h.b16 %v106
    %v493 = vunpack.c.l.b16 %v107
    %v494 = vunpack.c.h.b16 %v107
    %v495 = vunpack.c.l.b16 %v108
    %v496 = vunpack.c.h.b16 %v108
    %v497 = vunpack.c.l.b16 %v109
    %v498 = vunpack.c.h.b16 %v109
    %v499 = vunpack.c.l.b16 %v110
    %v500 = vunpack.c.h.b16 %v110
    %v501 = vunpack.c.l.b16 %v111
    %v502 = vunpack.c.h.b16 %v111
    %v503 = vunpack.c.l.b16 %v112
    %v504 = vunpack.c.h.b16 %v112
    %v505 = vunpack.c.l.b16 %v113
    %v506 = vunpack.c.h.b16 %v113
    %v507 = vunpack.c.l.b16 %v114
    %v508 = vunpack.c.h.b16 %v114
    %v509 = vunpack.c.l.b16 %v115
    %v510 = vunpack.c.h.b16 %v115
    %v511 = vunpack.c.l.b16 %v116
    %v512 = vunpack.c.h.b16 %v116
    %v513 = vunpack.c.l.b16 %v117
    %v514 = vunpack.c.h.b16 %v117
    %v515 = vunpack.c.l.b16 %v118
    %v516 = vunpack.c.h.b16 %v118
    %v517 = vunpack.c.l.b16 %v119
    %v518 = vunpack.c.h.b16 %v119
    %v519 = vunpack.c.l.b16 %v120
    %v520 = vunpack.c.h.b16 %v120
    %v521 = vunpack.c.l.b16 %v121
    %v522 = vunpack.c.h.b16 %v121
    %v523 = vunpack.c.l.b16 %v122
    %v524 = vunpack.c.h.b16 %v122
    %v525 = vunpack.c.l.b16 %v123
    %v526 = vunpack.c.h.b16 %v123
    %v527 = vunpack.c.l.b16 %v124
    %v528 = vunpack.c.h.b16 %v124
    %v529 = vunpack.c.l.b16 %v125
    %v530 = vunpack.c.h.b16 %v125
    %v531 = vunpack.c.l.b16 %v126
    %v532 = vunpack.c.h.b16 %v126
    %v533 = vunpack.c.l.b16 %v127
    %v534 = vunpack.c.h.b16 %v127
    %v535 = vunpack.c.l.b16 %v128
    %v536 = vunpack.c.h.b16 %v128
    %v537 = vunpack.c.l.b16 %v129
    %v538 = vunpack.c.h.b16 %v129
    %v539 = vunpack.c.l.b16 %v130
    %v540 = vunpack.c.h.b16 %v130
    %v541 = vunpack.c.l.b16 %v131
    %v542 = vunpack.c.h.b16 %v131
    %v543 = vunpack.c.l.b16 %v132
    %v544 = vunpack.c.h.b16 %v132
    %v545 = vunpack.c.l.b16 %v133
    %v546 = vunpack.c.h.b16 %v133
    %v547 = vunpack.c.l.b16 %v134
    %v548 = vunpack.c.h.b16 %v134
    %v549 = vunpack.c.l.b16 %v135
    %v550 = vunpack.c.h.b16 %v135
    %v551 = vunpack.c.l.b16 %v136
    %v552 = vunpack.c.h.b16 %v136
    %v553 = vunpack.c.l.b16 %v137
    %v554 = vunpack.c.h.b16 %v137
    %v555 = vunpack.c.l.b16 %v138
    %v556 = vunpack.c.h.b16 %v138
    %v557 = vunpack.c.l.b16 %v139
    %v558 = vunpack.c.h.b16 %v139
    %v559 = vunpack.c.l.b16 %v140
    %v560 = vunpack.c.h.b16 %v140
    %v561 = vunpack.c.l.b16 %v141
    %v562 = vunpack.c.h.b16 %v141
    %v563 = vunpack.c.l.b16 %v142
    %v564 = vunpack.c.h.b16 %v142
    %v565 = vunpack.c.l.b16 %v143
    %v566 = vunpack.c.h.b16 %v143
    %v567 = vunpack.c.l.b16 %v144
    %v568 = vunpack.c.h.b16 %v144
    %v569 = vunpack.c.l.b16 %v145
    %v570 = vunpack.c.h.b16 %v145
    %v571 = vunpack.c.l.b16 %v146
    %v572 = vunpack.c.h.b16 %v146
    %v573 = vpack.c.b16 %v321, %v317
    %v574 = vpack.c.b16 %v322, %v318
    %v575 = vpack.c.b16 %v323, %v319
    %v576 = vpack.c.b16 %v324, %v320
    %v577 = vpack.c.b16 %v329, %v325
    %v578 = vpack.c.b16 %v330, %v326
    %v579 = vpack.c.b16 %v331, %v327
    %v580 = vpack.c.b16 %v332, %v328
    %v581 = vpack.c.b16 %v337, %v333
    %v582 = vpack.c.b16 %v338, %v334
    %v583 = vpack.c.b16 %v339, %v335
    %v584 = vpack.c.b16 %v340, %v336
    %v585 = vpack.c.b16 %v345, %v341
    %v586 = vpack.c.b16 %v346, %v342
    %v587 = vpack.c.b16 %v347, %v343
    %v588 = vpack.c.b16 %v348, %v344
    %v589 = vpack.c.b16 %v353, %v349
    %v590 = vpack.c.b16 %v354, %v350
    %v591 = vpack.c.b16 %v355, %v351
    %v592 = vpack.c.b16 %v356, %v352
    %v593 = vpack.c.b16 %v361, %v357
    %v594 = vpack.c.b16 %v362, %v358
    %v595 = vpack.c.b16 %v363, %v359
    %v596 = vpack.c.b16 %v364, %v360
    %v597 = vpack.c.b16 %v369, %v365
    %v598 = vpack.c.b16 %v370, %v366
    %v599 = vpack.c.b16 %v371, %v367
    %v600 = vpack.c.b16 %v372, %v368
    %v601 = vpack.c.b16 %v377, %v373
    %v602 = vpack.c.b16 %v378, %v374
    %v603 = vpack.c.b16 %v379, %v375
    %v604 = vpack.c.b16 %v380, %v376
    %v605 = vpack.c.b16 %v385, %v381
    %v606 = vpack.c.b16 %v386, %v382
    %v607 = vpack.c.b16 %v387, %v383
    %v608 = vpack.c.b16 %v388, %v384
    %v609 = vpack.c.b16 %v393, %v389
    %v610 = vpack.c.b16 %v394, %v390
    %v611 = vpack.c.b16 %v395, %v391
    %v612 = vpack.c.b16 %v396, %v392
    %v613 = vpack.c.b16 %v401, %v397
    %v614 = vpack.c.b16 %v402, %v398
    %v615 = vpack.c.b16 %v403, %v399
    %v616 = vpack.c.b16 %v404, %v400
    %v617 = vpack.c.b16 %v409, %v405
    %v618 = vpack.c.b16 %v410, %v406
    %v619 = vpack.c.b16 %v411, %v407
    %v620 = vpack.c.b16 %v412, %v408
    %v621 = vpack.c.b16 %v417, %v413
    %v622 = vpack.c.b16 %v418, %v414
    %v623 = vpack.c.b16 %v419, %v415
    %v624 = vpack.c.b16 %v420, %v416
    %v625 = vpack.c.b16 %v425, %v421
    %v626 = vpack.c.b16 %v426, %v422
    %v627 = vpack.c.b16 %v427, %v423
    %v628 = vpack.c.b16 %v428, %v424
    %v629 = vpack.c.b16 %v433, %v429
    %v630 = vpack.c.b16 %v434, %v430
    %v631 = vpack.c.b16 %v435, %v431
    %v632 = vpack.c.b16 %v436, %v432
    %v633 = vpack.c.b16 %v441, %v437
    %v634 = vpack.c.b16 %v442, %v438
    %v635 = vpack.c.b16 %v443, %v439
    %v636 = vpack.c.b16 %v444, %v440
    %v637 = vpack.c.b16 %v449, %v445
    %v638 = vpack.c.b16 %v450, %v446
    %v639 = vpack.c.b16 %v451, %v447
    %v640 = vpack.c.b16 %v452, %v448
    %v641 = vpack.c.b16 %v457, %v453
    %v642 = vpack.c.b16 %v458, %v454
    %v643 = vpack.c.b16 %v459, %v455
    %v644 = vpack.c.b16 %v460, %v456
    %v645 = vpack.c.b16 %v465, %v461
    %v646 = vpack.c.b16 %v466, %v462
    %v647 = vpack.c.b16 %v467, %v463
    %v648 = vpack.c.b16 %v468, %v464
    %v649 = vpack.c.b16 %v473, %v469
    %v650 = vpack.c.b16 %v474, %v470
    %v651 = vpack.c.b16 %v475, %v471
    %v652 = vpack.c.b16 %v476, %v472
    %v653 = vpack.c.b16 %v481, %v477
    %v654 = vpack.c.b16 %v482, %v478
    %v655 = vpack.c.b16 %v483, %v479
    %v656 = vpack.c.b16 %v484, %v480
    %v657 = vpack.c.b16 %v489, %v485
    %v658 = vpack.c.b16 %v490, %v486
    %v659 = vpack.c.b16 %v491, %v487
    %v660 = vpack.c.b16 %v492, %v488
    %v661 = vpack.c.b16 %v497, %v493
    %v662 = vpack.c.b16 %v498, %v494
    %v663 = vpack.c.b16 %v499, %v495
    %v664 = vpack.c.b16 %v500, %v496
    %v665 = vpack.c.b16 %v505, %v501
    %v666 = vpack.c.b16 %v506, %v502
    %v667 = vpack.c.b16 %v507, %v503
    %v668 = vpack.c.b16 %v508, %v504
    %v669 = vpack.c.b16 %v513, %v509
    %v670 = vpack.c.b16 %v514, %v510
    %v671 = vpack.c.b16 %v515, %v511
    %v672 = vpack.c.b16 %v516, %v512
    %v673 = vpack.c.b16 %v521, %v517
    %v674 = vpack.c.b16 %v522, %v518
    %v675 = vpack.c.b16 %v523, %v519
    %v676 = vpack.c.b16 %v524, %v520
    %v677 = vpack.c.b16 %v529, %v525
    %v678 = vpack.c.b16 %v530, %v526
    %v679 = vpack.c.b16 %v531, %v527
    %v680 = vpack.c.b16 %v532, %v528
    %v681 = vpack.c.b16 %v537, %v533
    %v682 = vpack.c.b16 %v538, %v534
    %v683 = vpack.c.b16 %v539, %v535
    %v684 = vpack.c.b16 %v540, %v536
    %v685 = vpack.c.b16 %v545, %v541
    %v686 = vpack.c.b16 %v546, %v542
    %v687 = vpack.c.b16 %v547, %v543
    %v688 = vpack.c.b16 %v548, %v544
    %v689 = vpack.c.b16 %v553, %v549
    %v690 = vpack.c.b16 %v554, %v550
    %v691 = vpack.c.b16 %v555, %v551
    %v692 = vpack.c.b16 %v556, %v552
    %v693 = vpack.c.b16 %v561, %v557
    %v694 = vpack.c.b16 %v562, %v558
    %v695 = vpack.c.b16 %v563, %v559
    %v696 = vpack.c.b16 %v564, %v560
    %v697 = vpack.c.b16 %v569, %v565
    %v698 = vpack.c.b16 %v570, %v566
    %v699 = vpack.c.b16 %v571, %v567
    %v700 = vpack.c.b16 %v572, %v568
    %829 = vmatprep.subr.bf16.mxu0 %v574
    %830 = vmatpush1.bf16.msra.mxu0 %v573
    %831 = vmatprep.subr.bf16.mxu0 %v578
    %832 = vmatpush1.bf16.msra.mxu0 %v577
    %833 = vmatprep.subr.bf16.mxu0 %v582
    %834 = vmatpush1.bf16.msra.mxu0 %v581
    %835 = vmatprep.subr.bf16.mxu0 %v586
    %836 = vmatpush1.bf16.msra.mxu0 %v585
    %837 = vmatprep.subr.bf16.mxu0 %v590
    %838 = vmatpush1.bf16.msra.mxu0 %v589
    %839 = vmatprep.subr.bf16.mxu0 %v594
    %840 = vmatpush1.bf16.msra.mxu0 %v593
    %841 = vmatprep.subr.bf16.mxu0 %v598
    %842 = vmatpush1.bf16.msra.mxu0 %v597
    %843 = vmatprep.subr.bf16.mxu0 %v602
    %844 = vmatpush1.bf16.msra.mxu0 %v601
    %845 = vmatprep.subr.bf16.mxu0 %v606
    %846 = vmatpush1.bf16.msra.mxu0 %v605
    %847 = vmatprep.subr.bf16.mxu0 %v610
    %848 = vmatpush1.bf16.msra.mxu0 %v609
    %849 = vmatprep.subr.bf16.mxu0 %v614
    %850 = vmatpush1.bf16.msra.mxu0 %v613
    %851 = vmatprep.subr.bf16.mxu0 %v618
    %852 = vmatpush1.bf16.msra.mxu0 %v617
    %853 = vmatprep.subr.bf16.mxu0 %v622
    %854 = vmatpush1.bf16.msra.mxu0 %v621
    %855 = vmatprep.subr.bf16.mxu0 %v626
    %856 = vmatpush1.bf16.msra.mxu0 %v625
    %857 = vmatprep.subr.bf16.mxu0 %v630
    %858 = vmatpush1.bf16.msra.mxu0 %v629
    %859 = vmatprep.subr.bf16.mxu0 %v634
    %860 = vmatpush1.bf16.msra.mxu0 %v633
    %861 = vmatprep.mubr.bf16.mxu0 %v182
    %862 = vmatmul.mubr.bf16.gmra.mrb[0].mxu0 %v181
    %v863 = vpop.f32.mrb[0].mxu0
    %v864 = vadd.f32 %v152, %v863
    %v865 = vpop.f32.mrb[0].mxu0
    %v866 = vadd.f32 %v156, %v865
    %v867 = vpop.f32.mrb[0].mxu0
    %v868 = vadd.f32 %v152, %v867
    %v869 = vpop.f32.mrb[0].mxu0
    %v870 = vadd.f32 %v156, %v869
    %871 = vdwg.mxu0
    %872 = vmatprep.subr.bf16.mxu0 %v638
    %873 = vmatpush1.bf16.msra.mxu0 %v637
    %874 = vmatprep.subr.bf16.mxu0 %v642
    %875 = vmatpush1.bf16.msra.mxu0 %v641
    %876 = vmatprep.subr.bf16.mxu0 %v646
    %877 = vmatpush1.bf16.msra.mxu0 %v645
    %878 = vmatprep.subr.bf16.mxu0 %v650
    %879 = vmatpush1.bf16.msra.mxu0 %v649
    %880 = vmatprep.subr.bf16.mxu0 %v654
    %881 = vmatpush1.bf16.msra.mxu0 %v653
    %882 = vmatprep.subr.bf16.mxu0 %v658
    %883 = vmatpush1.bf16.msra.mxu0 %v657
    %884 = vmatprep.subr.bf16.mxu0 %v662
    %885 = vmatpush1.bf16.msra.mxu0 %v661
    %886 = vmatprep.subr.bf16.mxu0 %v666
    %887 = vmatpush1.bf16.msra.mxu0 %v665
    %888 = vmatprep.subr.bf16.mxu0 %v670
    %889 = vmatpush1.bf16.msra.mxu0 %v669
    %890 = vmatprep.subr.bf16.mxu0 %v674
    %891 = vmatpush1.bf16.msra.mxu0 %v673
    %892 = vmatprep.subr.bf16.mxu0 %v678
    %893 = vmatpush1.bf16.msra.mxu0 %v677
    %894 = vmatprep.subr.bf16.mxu0 %v682
    %895 = vmatpush1.bf16.msra.mxu0 %v681
    %896 = vmatprep.subr.bf16.mxu0 %v686
    %897 = vmatpush1.bf16.msra.mxu0 %v685
    %898 = vmatprep.subr.bf16.mxu0 %v690
    %899 = vmatpush1.bf16.msra.mxu0 %v689
    %900 = vmatprep.subr.bf16.mxu0 %v694
    %901 = vmatpush1.bf16.msra.mxu0 %v693
    %902 = vmatprep.subr.bf16.mxu0 %v698
    %903 = vmatpush1.bf16.msra.mxu0 %v697
    %904 = vmatprep.mubr.bf16.mxu0 %v184
    %905 = vmatmul.mubr.bf16.gmra.mrb[0].mxu0 %v183
    %v906 = vpop.f32.mrb[0].mxu0
    %v907 = vadd.f32 %v864, %v906
    %v908 = vpop.f32.mrb[0].mxu0
    %v909 = vadd.f32 %v866, %v908
    %v910 = vpop.f32.mrb[0].mxu0
    %v911 = vadd.f32 %v868, %v910
    %v912 = vpop.f32.mrb[0].mxu0
    %v913 = vadd.f32 %v870, %v912
    %914 = vdwg.mxu0
    %915 = vmatprep.subr.bf16.mxu0 %v576
    %916 = vmatpush1.bf16.msra.mxu0 %v575
    %917 = vmatprep.subr.bf16.mxu0 %v580
    %918 = vmatpush1.bf16.msra.mxu0 %v579
    %919 = vmatprep.subr.bf16.mxu0 %v584
    %920 = vmatpush1.bf16.msra.mxu0 %v583
    %921 = vmatprep.subr.bf16.mxu0 %v588
    %922 = vmatpush1.bf16.msra.mxu0 %v587
    %923 = vmatprep.subr.bf16.mxu0 %v592
    %924 = vmatpush1.bf16.msra.mxu0 %v591
    %925 = vmatprep.subr.bf16.mxu0 %v596
    %926 = vmatpush1.bf16.msra.mxu0 %v595
    %927 = vmatprep.subr.bf16.mxu0 %v600
    %928 = vmatpush1.bf16.msra.mxu0 %v599
    %929 = vmatprep.subr.bf16.mxu0 %v604
    %930 = vmatpush1.bf16.msra.mxu0 %v603
    %931 = vmatprep.subr.bf16.mxu0 %v608
    %932 = vmatpush1.bf16.msra.mxu0 %v607
    %933 = vmatprep.subr.bf16.mxu0 %v612
    %934 = vmatpush1.bf16.msra.mxu0 %v611
    %935 = vmatprep.subr.bf16.mxu0 %v616
    %936 = vmatpush1.bf16.msra.mxu0 %v615
    %937 = vmatprep.subr.bf16.mxu0 %v620
    %938 = vmatpush1.bf16.msra.mxu0 %v619
    %939 = vmatprep.subr.bf16.mxu0 %v624
    %940 = vmatpush1.bf16.msra.mxu0 %v623
    %941 = vmatprep.subr.bf16.mxu0 %v628
    %942 = vmatpush1.bf16.msra.mxu0 %v627
    %943 = vmatprep.subr.bf16.mxu0 %v632
    %944 = vmatpush1.bf16.msra.mxu0 %v631
    %945 = vmatprep.subr.bf16.mxu0 %v636
    %946 = vmatpush1.bf16.msra.mxu0 %v635
    %947 = vmatprep.mubr.bf16.mxu0 %v182
    %948 = vmatmul.mubr.bf16.gmra.mrb[0].mxu0 %v181
    %v949 = vpop.f32.mrb[0].mxu0
    %v950 = vadd.f32 %v160, %v949
    %v951 = vpop.f32.mrb[0].mxu0
    %v952 = vadd.f32 %v164, %v951
    %v953 = vpop.f32.mrb[0].mxu0
    %v954 = vadd.f32 %v160, %v953
    %v955 = vpop.f32.mrb[0].mxu0
    %v956 = vadd.f32 %v164, %v955
    %957 = vdwg.mxu0
    %958 = vmatprep.subr.bf16.mxu0 %v640
    %959 = vmatpush1.bf16.msra.mxu0 %v639
    %960 = vmatprep.subr.bf16.mxu0 %v644
    %961 = vmatpush1.bf16.msra.mxu0 %v643
    %962 = vmatprep.subr.bf16.mxu0 %v648
    %963 = vmatpush1.bf16.msra.mxu0 %v647
    %964 = vmatprep.subr.bf16.mxu0 %v652
    %965 = vmatpush1.bf16.msra.mxu0 %v651
    %966 = vmatprep.subr.bf16.mxu0 %v656
    %967 = vmatpush1.bf16.msra.mxu0 %v655
    %968 = vmatprep.subr.bf16.mxu0 %v660
    %969 = vmatpush1.bf16.msra.mxu0 %v659
    %970 = vmatprep.subr.bf16.mxu0 %v664
    %971 = vmatpush1.bf16.msra.mxu0 %v663
    %972 = vmatprep.subr.bf16.mxu0 %v668
    %973 = vmatpush1.bf16.msra.mxu0 %v667
    %974 = vmatprep.subr.bf16.mxu0 %v672
    %975 = vmatpush1.bf16.msra.mxu0 %v671
    %976 = vmatprep.subr.bf16.mxu0 %v676
    %977 = vmatpush1.bf16.msra.mxu0 %v675
    %978 = vmatprep.subr.bf16.mxu0 %v680
    %979 = vmatpush1.bf16.msra.mxu0 %v679
    %980 = vmatprep.subr.bf16.mxu0 %v684
    %981 = vmatpush1.bf16.msra.mxu0 %v683
    %982 = vmatprep.subr.bf16.mxu0 %v688
    %983 = vmatpush1.bf16.msra.mxu0 %v687
    %984 = vmatprep.subr.bf16.mxu0 %v692
    %985 = vmatpush1.bf16.msra.mxu0 %v691
    %986 = vmatprep.subr.bf16.mxu0 %v696
    %987 = vmatpush1.bf16.msra.mxu0 %v695
    %988 = vmatprep.subr.bf16.mxu0 %v700
    %989 = vmatpush1.bf16.msra.mxu0 %v699
    %990 = vmatprep.mubr.bf16.mxu0 %v184
    %991 = vmatmul.mubr.bf16.gmra.mrb[0].mxu0 %v183
    %v992 = vpop.f32.mrb[0].mxu0
    %v993 = vadd.f32 %v950, %v992
    %v994 = vpop.f32.mrb[0].mxu0
    %v995 = vadd.f32 %v952, %v994
    %v996 = vpop.f32.mrb[0].mxu0
    %v997 = vadd.f32 %v954, %v996
    %v998 = vpop.f32.mrb[0].mxu0
    %v999 = vadd.f32 %v956, %v998
    %1000 = vdwg.mxu0
    %v1001 = vmax.f32 %v907, 0.0
    %v1002 = vmax.f32 %v909, 0.0
    %v1003 = vmax.f32 %v993, 0.0
    %v1004 = vmax.f32 %v995, 0.0
    %v1005 = vmax.f32 %v911, 0.0
    %v1006 = vmax.f32 %v913, 0.0
    %v1007 = vmax.f32 %v997, 0.0
    %v1008 = vmax.f32 %v999, 0.0
    %1009 = vst [vmem:[#allocation2] sm:$0xff] %v1001
    %1010 = vst [vmem:[#allocation2 + $0x8] sm:$0xff] %v1002
    %1011 = vst [vmem:[#allocation2 + $0x10] sm:$0xff] %v1003
    %vm1012 = vcmask 130048
    %1013 = vst.msk [vmem:[#allocation2 + $0x18] sm:$0xff] %vm1012, %v1004
    %1014 = vst [vmem:[#allocation2 + $0x20] sm:$0xff] %v1005
    %1015 = vst [vmem:[#allocation2 + $0x28] sm:$0xff] %v1006
    %1016 = vst [vmem:[#allocation2 + $0x30] sm:$0xff] %v1007
    %1017 = vst.msk [vmem:[#allocation2 + $0x38] sm:$0xff] %vm1012, %v1008
    // Predicated region
    $region14: #{generate_word_forward.1} parent=1 // pred_check
      _
    $region15: #{generate_word_forward.1} parent=1 // pred_check_branch
      %1019 = sbr.rel (0) target = $region17
    $region16: #{generate_word_forward.1} parent=1 // pred_region
      %s1021 = ssub.s32 1024, 512
      %1022 = vsyncadd [#allocation3], %s1021
      %s1023 = sshll.u32 [#allocation2], 4
      %s1024 = int_to_ptr.vmem [resolvable:$true] %s1023
      %1029 = dma.vmem_to_hbm [thread:$0]  %s1024, 512, %s3, [#allocation3], 512, 512, 32
    $region17: #{generate_word_forward.1} parent=1 // pred_fallthru
      _
    // Predicated region
    $region18: #{generate_word_forward.1} parent=1 // pred_check
      _
    $region19: #{generate_word_forward.1} parent=1 // pred_check_branch
      %1031 = sbr.rel (0) target = $region21
    $region20: #{generate_word_forward.1} parent=1 // pred_region
      %1032 = dma.done [#allocation3], 1024
    $region21: #{generate_word_forward.1} parent=1 // pred_fallthru
      _
    %1033 = vsyncpa [#allocation3], 1

</llo_original>
